<compile_context>
chip_gen: v6e
topology: v6e:2x2x1
jax: 0.10.0
libtpu: 0.0.40
codegen_flags: <defaults>
</compile_context>

<pallas_src>
import functools

import numpy as np
import jax
import jax.numpy as jnp
from jax import lax
from jax.experimental import pallas as pl
from jax.experimental.pallas import tpu as pltpu


PATCH = 8      # patch size
EMBED = 128    # embedding dim (multiple of 128 -> lane-dense vregs/stores)
LN_EPS = 1e-6  # DINOv2 LayerNorm eps


# ---------------------------------------------------------------------------
# Pallas kernels
# ---------------------------------------------------------------------------

def _fused_pool_kernel(p_ref, w_ref, posb_ref, g_ref, beta_ref, o_ref, acc_ref,
                       *, np_total, inv_np):
    """patch-embed + pos add + LayerNorm + token-mean pooling, one row tile.

    p_ref:    (bb, tm, K)  flattened patches for this (batch-block, row tile)
    w_ref:    (K, D)       patch-embed weight (shared across the grid)
    posb_ref: (1, tm, D)   pos-embed + conv bias, broadcast across bb images
    g/beta:   (1, D)       LayerNorm affine
    o_ref:    (bb, 1, D)   pooled features for this batch block
    acc_ref:  (bb, D) f32  VMEM token-sum accumulator, persists across row tiles
    """
    t = pl.program_id(1)

    @pl.when(t == 0)
    def _init():
        acc_ref[...] = jnp.zeros_like(acc_ref)

    bb, tm, K = p_ref.shape
    D = w_ref.shape[1]

    # Patch embedding on the MXU: (bb*tm, K) @ (K, D), f32 accumulation.
    emb = jnp.dot(p_ref[...].reshape(bb * tm, K), w_ref[...],
                  preferred_element_type=jnp.float32).reshape(bb, tm, D)
    emb = emb + posb_ref[...].astype(jnp.float32)

    # Single-pass LayerNorm statistics (sum & sum-of-squares in one sweep).
    inv_d = 1.0 / D
    s1 = jnp.sum(emb, axis=-1, keepdims=True)
    s2 = jnp.sum(emb * emb, axis=-1, keepdims=True)
    mu = s1 * inv_d
    var = s2 * inv_d - mu * mu
    tok = (emb - mu) * lax.rsqrt(var + LN_EPS) \
          * g_ref[...].astype(jnp.float32) + beta_ref[...].astype(jnp.float32)

    # Masked tail (only emitted when Np % tm != 0): out-of-range rows of the
    # last tile carry unspecified data and must not enter the pooled sum.
    if np_total % tm != 0:
        rows = lax.broadcasted_iota(jnp.int32, (tm, 1), 0) + t * tm
        tok = jnp.where(rows < np_total, tok, 0.0)

    # Pooling accumulation: sublane reduce (XLU), hidden under next tile's DMA.
    acc_ref[...] += jnp.sum(tok, axis=1)

    @pl.when(t == pl.num_programs(1) - 1)
    def _finalize():
        o_ref[...] = (acc_ref[...] * inv_np)[:, None, :].astype(o_ref.dtype)


def _fused_tokens_kernel(p_ref, w_ref, posb_ref, g_ref, beta_ref, o_ref):
    """patch-embed + pos add + LayerNorm, writing normalized patch tokens."""
    bb, tm, K = p_ref.shape
    D = w_ref.shape[1]
    emb = jnp.dot(p_ref[...].reshape(bb * tm, K), w_ref[...],
                  preferred_element_type=jnp.float32).reshape(bb, tm, D)
    emb = emb + posb_ref[...].astype(jnp.float32)
    inv_d = 1.0 / D
    s1 = jnp.sum(emb, axis=-1, keepdims=True)
    s2 = jnp.sum(emb * emb, axis=-1, keepdims=True)
    mu = s1 * inv_d
    var = s2 * inv_d - mu * mu
    tok = (emb - mu) * lax.rsqrt(var + LN_EPS) \
          * g_ref[...].astype(jnp.float32) + beta_ref[...].astype(jnp.float32)
    # Rows past Np in the final (partial) tile are clipped on the store.
    o_ref[...] = tok.astype(o_ref.dtype)


# ---------------------------------------------------------------------------
# Tiling / VMEM budget helpers
# ---------------------------------------------------------------------------

def _vmem_budget_bytes():
    """~3/4 of physical VMEM: v7x 64 MiB -> ~48 MiB scoped, v5e/v6e 128 MiB ->
    ~96 MiB. Falls back to the conservative v7x figure if the query fails."""
    cap = 64 << 20
    try:
        cap = int(getattr(pltpu.get_tpu_info(), "vmem_capacity_bytes", cap))
    except Exception:
        pass
    return min((cap * 3) // 4, 96 << 20)


def _block_vmem_bytes(tm, bb, K, D, stream_bytes, out_bytes, tokens_out):
    """Double-buffered per-step block bytes + accumulator scratch."""
    out_rows = tm if tokens_out else 1
    per_step = (bb * tm * K * stream_bytes      # patches tile
                + K * D * stream_bytes          # weight
                + tm * D * stream_bytes         # pos(+bias) tile
                + 2 * D * 4                     # gamma, beta (f32)
                + bb * out_rows * D * out_bytes)
    return 2 * per_step + bb * D * 4


def _pick_bb(B, max_bb=8):
    """Images per grid step: share weight/pos across bb images and amortize
    per-step overhead, while keeping the parallel batch grid axis >= 2 entries
    so both v7x TensorCores get work."""
    if B <= 2:
        return 1
    best = 1
    for bb in range(1, min(max_bb, B) + 1):
        if B % bb == 0 and B // bb >= 2:
            best = bb
    return best


def _pick_row_tile(np_count, bb, K, D, stream_bytes, out_bytes, tokens_out,
                   budget, max_tile):
    """Largest row tile (multiple of 8, target up to `max_tile`) whose blocks
    fit the VMEM budget; full extent when Np itself fits (no ragged tail)."""
    def fits(tm):
        return _block_vmem_bytes(tm, bb, K, D, stream_bytes, out_bytes,
                                 tokens_out) <= budget
    if np_count <= 8:
        return np_count
    if np_count <= max_tile and fits(np_count):
        return np_count
    best, tm, cap = 8, 8, min(max_tile, np_count)
    while tm <= cap and fits(tm):
        best = tm
        tm += 8
    return best


def _in_specs(bb, tm, K, D):
    return [
        pl.BlockSpec((bb, tm, K), lambda bi, ti: (bi, ti, 0)),   # patches
        pl.BlockSpec((K, D), lambda bi, ti: (0, 0)),             # weight
        pl.BlockSpec((1, tm, D), lambda bi, ti: (0, ti, 0)),     # pos + bias
        pl.BlockSpec((1, D), lambda bi, ti: (0, 0)),             # gamma
        pl.BlockSpec((1, D), lambda bi, ti: (0, 0)),             # beta
    ]


# ---------------------------------------------------------------------------
# Pallas wrappers
# ---------------------------------------------------------------------------

def fused_pooled_features(patches, w, pos_plus_b, gamma, beta, *,
                          matmul_dtype=jnp.bfloat16, out_dtype=jnp.float32,
                          max_row_tile=1024):
    """(B, Np, K) flattened patches -> (B, D) pooled features, fully fused."""
    B, Np, K = patches.shape
    D = w.shape[1]
    bb = _pick_bb(B)
    budget = _vmem_budget_bytes()
    sbytes = np.dtype(matmul_dtype).itemsize
    obytes = np.dtype(out_dtype).itemsize
    tm = _pick_row_tile(Np, bb, K, D, sbytes, obytes, False, budget, max_row_tile)
    nt = pl.cdiv(Np, tm)
    vmem_limit = int(min(budget, max(
        _block_vmem_bytes(tm, bb, K, D, sbytes, obytes, False) + (8 << 20),
        32 << 20)))

    p = patches.astype(matmul_dtype)     # bf16 streams halve HBM traffic
    wm = w.astype(matmul_dtype)
    posb = pos_plus_b.astype(matmul_dtype)
    g = gamma.reshape(1, D).astype(jnp.float32)
    bt = beta.reshape(1, D).astype(jnp.float32)

    kernel = functools.partial(_fused_pool_kernel, np_total=Np,
                               inv_np=1.0 / float(Np))
    out = pl.pallas_call(
        kernel,
        out_shape=jax.ShapeDtypeStruct((B, 1, D), out_dtype),
        grid_spec=pltpu.PrefetchScalarGridSpec(
            num_scalar_prefetch=0,
            grid=(B // bb, nt),           # (parallel batch, arbitrary row tiles)
            in_specs=_in_specs(bb, tm, K, D),
            out_specs=pl.BlockSpec((bb, 1, D), lambda bi, ti: (bi, 0, 0)),
            scratch_shapes=[pltpu.VMEM((bb, D), jnp.float32)],
        ),
        compiler_params=pltpu.CompilerParams(
            dimension_semantics=("parallel", "arbitrary"),
            vmem_limit_bytes=vmem_limit,
        ),
    )(p, wm, posb, g, bt)
    return out.reshape(B, D)


def fused_patch_tokens(patches, w, pos_plus_b, gamma, beta, *,
                       matmul_dtype=jnp.bfloat16, out_dtype=jnp.float32,
                       max_row_tile=1024):
    """(B, Np, K) flattened patches -> (B, Np, D) normalized patch tokens.
    Pass out_dtype=jnp.bfloat16 to halve the dominant token-store bandwidth
    when the downstream consumer tolerates it."""
    B, Np, K = patches.shape
    D = w.shape[1]
    bb = _pick_bb(B)
    budget = _vmem_budget_bytes()
    sbytes = np.dtype(matmul_dtype).itemsize
    obytes = np.dtype(out_dtype).itemsize
    tm = _pick_row_tile(Np, bb, K, D, sbytes, obytes, True, budget, max_row_tile)
    nt = pl.cdiv(Np, tm)
    vmem_limit = int(min(budget, max(
        _block_vmem_bytes(tm, bb, K, D, sbytes, obytes, True) + (8 << 20),
        32 << 20)))

    p = patches.astype(matmul_dtype)
    wm = w.astype(matmul_dtype)
    posb = pos_plus_b.astype(matmul_dtype)
    g = gamma.reshape(1, D).astype(jnp.float32)
    bt = beta.reshape(1, D).astype(jnp.float32)

    return pl.pallas_call(
        _fused_tokens_kernel,
        out_shape=jax.ShapeDtypeStruct((B, Np, D), out_dtype),
        grid_spec=pltpu.PrefetchScalarGridSpec(
            num_scalar_prefetch=0,
            grid=(B // bb, nt),
            in_specs=_in_specs(bb, tm, K, D),
            out_specs=pl.BlockSpec((bb, tm, D), lambda bi, ti: (bi, ti, 0)),
        ),
        compiler_params=pltpu.CompilerParams(
            dimension_semantics=("parallel", "parallel"),
            vmem_limit_bytes=vmem_limit,
        ),
    )(p, wm, posb, g, bt)


# ---------------------------------------------------------------------------
# Synthetic DINOv2-like base model + wrapper
# ---------------------------------------------------------------------------

def init_params(key, in_chans, img_h, img_w):
    nh, nw = img_h // PATCH, img_w // PATCH
    n_tok = 1 + nh * nw
    k = in_chans * PATCH * PATCH
    k1, k2, k3, k4 = jax.random.split(key, 4)
    return {
        "patch_w": 0.02 * jax.random.normal(k1, (k, EMBED), jnp.float32),
        "patch_b": jnp.zeros((EMBED,), jnp.float32),
        "cls": 0.02 * jax.random.normal(k2, (1, 1, EMBED), jnp.float32),
        "pos": 0.02 * jax.random.normal(k3, (1, n_tok, EMBED), jnp.float32),
        "gamma": jnp.ones((EMBED,), jnp.float32)
                 + 0.01 * jax.random.normal(k4, (EMBED,), jnp.float32),
        "beta": jnp.zeros((EMBED,), jnp.float32),
    }


def _extract_patches(x):
    """NCHW image -> (B, Np, C*PATCH*PATCH). Per-patch flatten order (C, ph, pw)
    matches nn.Conv2d(C, D, PATCH, PATCH) weight flattening. The wrappers are
    jitted so this transpose fuses with the bf16 cast feeding the kernel.
    TODO(synk): fold extraction into the kernel via strided DMA of NCHW image
    strips to remove the remaining HBM round trip of the patch tensor."""
    B, C, H, W = x.shape
    nh, nw = H // PATCH, W // PATCH
    p = x.reshape(B, C, nh, PATCH, nw, PATCH)
    p = p.transpose(0, 2, 4, 1, 3, 5).reshape(B, nh * nw, C * PATCH * PATCH)
    return p


@functools.partial(jax.jit,
                   static_argnames=("matmul_dtype", "out_dtype", "max_row_tile"))
def dinov2_wrapper_forward(x, params, *, matmul_dtype=jnp.bfloat16,
                           out_dtype=jnp.float32, max_row_tile=1024):
    """DinoV2Wrapper.forward -> token embeddings (B, 1+Np, D)."""
    B = x.shape[0]
    patches = _extract_patches(x)
    pos_plus_b = params["pos"][:, 1:, :] + params["patch_b"]   # fold conv bias
    patch_tok = fused_patch_tokens(
        patches, params["patch_w"], pos_plus_b, params["gamma"], params["beta"],
        matmul_dtype=matmul_dtype, out_dtype=out_dtype, max_row_tile=max_row_tile)

    # CLS row: one token per image; LN in plain jnp (a dedicated kernel for a
    # single (1, D) row is not worth a launch). No conv bias on the CLS token.
    cls = jnp.broadcast_to(params["cls"] + params["pos"][:, :1, :],
                           (B, 1, EMBED)).astype(jnp.float32)
    mu = jnp.mean(cls, axis=-1, keepdims=True)
    var = jnp.mean((cls - mu) ** 2, axis=-1, keepdims=True)
    cls = (cls - mu) * lax.rsqrt(var + LN_EPS) * params["gamma"] + params["beta"]
    return jnp.concatenate([cls.astype(patch_tok.dtype), patch_tok], axis=1)


@functools.partial(jax.jit, static_argnames=("matmul_dtype", "max_row_tile"))
def dinov2_wrapper_forward_features(x, params, *, matmul_dtype=jnp.bfloat16,
                                    max_row_tile=1024):
    """DinoV2Wrapper.forward_features -> (B, D) pooled patch features.

    Mathematically identical to pooling forward()'s tokens with CLS dropped
    (AdaptiveAvgPool1d(1)), but fully fused so the (B, 1+Np, D) token tensor
    never touches HBM."""
    patches = _extract_patches(x)
    pos_plus_b = params["pos"][:, 1:, :] + params["patch_b"]
    return fused_pooled_features(
        patches, params["patch_w"], pos_plus_b, params["gamma"], params["beta"],
        matmul_dtype=matmul_dtype, max_row_tile=max_row_tile)


# ---------------------------------------------------------------------------
# Pure-JAX reference for correctness checks
# ---------------------------------------------------------------------------

def reference_forward(x, params):
    B, C, H, W = x.shape
    nh, nw = H // PATCH, W // PATCH
    Np = nh * nw
    p = x.reshape(B, C, nh, PATCH, nw, PATCH)
    p = p.transpose(0, 2, 4, 1, 3, 5).reshape(B * Np, C * PATCH * PATCH)
    emb = (p @ params["patch_w"] + params["patch_b"]).reshape(B, Np, EMBED)
    cls = jnp.broadcast_to(params["cls"], (B, 1, EMBED))
    tok = jnp.concatenate([cls, emb], axis=1) + params["pos"]
    mu = jnp.mean(tok, axis=-1, keepdims=True)
    var = jnp.mean((tok - mu) ** 2, axis=-1, keepdims=True)
    tok = (tok - mu) * lax.rsqrt(var + LN_EPS) * params["gamma"] + params["beta"]
    return tok


def reference_forward_features(x, params):
    tok = reference_forward(x, params)
    return jnp.mean(tok[:, 1:, :], axis=1)


if __name__ == "__main__":
    key = jax.random.PRNGKey(0)
    kx, kp, kx2, kp2 = jax.random.split(key, 4)

    # --- Test 1: small shapes, tile == full extent, B=2 ----------------------
    B, C, H, W = 2, 4, 16, 16
    x = jax.random.normal(kx, (B, C, H, W), jnp.float32)
    params = init_params(kp, C, H, W)
    n_tok = 1 + (H // PATCH) * (W // PATCH)

    feats = jax.block_until_ready(dinov2_wrapper_forward_features(x, params))
    assert feats.shape == (B, EMBED), feats.shape
    ref_feats = reference_forward_features(x, params)
    assert jnp.allclose(feats, ref_feats, atol=3e-2, rtol=3e-2), (
        float(jnp.max(jnp.abs(feats - ref_feats))))

    feats32 = jax.block_until_ready(
        dinov2_wrapper_forward_features(x, params, matmul_dtype=jnp.float32))
    assert jnp.allclose(feats32, ref_feats, atol=1e-3, rtol=1e-3), (
        float(jnp.max(jnp.abs(feats32 - ref_feats))))

    toks = jax.block_until_ready(dinov2_wrapper_forward(x, params))
    assert toks.shape == (B, n_tok, EMBED), toks.shape
    ref_toks = reference_forward(x, params)
    assert jnp.allclose(toks, ref_toks, atol=3e-2, rtol=3e-2), (
        float(jnp.max(jnp.abs(toks - ref_toks))))

    toks32 = jax.block_until_ready(
        dinov2_wrapper_forward(x, params, matmul_dtype=jnp.float32))
    assert jnp.allclose(toks32, ref_toks, atol=1e-3, rtol=1e-3), (
        float(jnp.max(jnp.abs(toks32 - ref_toks))))

    # --- Test 2: Np (=15) not divisible by the tile -> cdiv grid + masked tail
    B2, C2, H2, W2 = 3, 4, 24, 40
    x2 = jax.random.normal(kx2, (B2, C2, H2, W2), jnp.float32)
    params2 = init_params(kp2, C2, H2, W2)

    feats2 = jax.block_until_ready(
        dinov2_wrapper_forward_features(x2, params2, max_row_tile=8))
    ref_feats2 = reference_forward_features(x2, params2)
    assert jnp.allclose(feats2, ref_feats2, atol=3e-2, rtol=3e-2), (
        float(jnp.max(jnp.abs(feats2 - ref_feats2))))

    toks2 = jax.block_until_ready(
        dinov2_wrapper_forward(x2, params2, max_row_tile=8))
    ref_toks2 = reference_forward(x2, params2)
    assert toks2.shape == ref_toks2.shape, toks2.shape
    assert jnp.allclose(toks2, ref_toks2, atol=3e-2, rtol=3e-2), (
        float(jnp.max(jnp.abs(toks2 - ref_toks2))))

    print("KERNEL_OK")
</pallas_src>

<mosaic_0001>
module attributes {stable_mosaic.version = 11 : i64} {
  func.func @_fused_pool_kernel(%arg0: i32, %arg1: i32, %arg2: memref<1x4x256xbf16, #tpu.memory_space<vmem>>, %arg3: memref<256x128xbf16, #tpu.memory_space<vmem>>, %arg4: memref<1x4x128xbf16, #tpu.memory_space<vmem>>, %arg5: memref<1x128xf32, #tpu.memory_space<vmem>>, %arg6: memref<1x128xf32, #tpu.memory_space<vmem>>, %arg7: memref<1x1x128xf32, #tpu.memory_space<vmem>>, %arg8: memref<1x128xf32, #tpu.memory_space<vmem>>) attributes {dimension_semantics = [#tpu.dimension_semantics<parallel>, #tpu.dimension_semantics<arbitrary>], iteration_bounds = array<i64: 2, 1>, scalar_prefetch = 0 : i64, scratch_operands = 1 : i64, tpu.core_type = #tpu.core_type<tc>, window_params = [{transform_indices = @transform_0, window_bounds = array<i64: 1, 4, 256>}, {pipeline_mode = #tpu.pipeline_mode<synchronous>, transform_indices = @transform_1, window_bounds = array<i64: 256, 128>}, {transform_indices = @transform_2, window_bounds = array<i64: 1, 4, 128>}, {pipeline_mode = #tpu.pipeline_mode<synchronous>, transform_indices = @transform_3, window_bounds = array<i64: 1, 128>}, {pipeline_mode = #tpu.pipeline_mode<synchronous>, transform_indices = @transform_4, window_bounds = array<i64: 1, 128>}, {transform_indices = @transform_5, window_bounds = array<i64: 1, 1, 128>}]} {
    %c0_i32 = arith.constant 0 : i32
    %0 = arith.cmpi eq, %arg1, %c0_i32 : i32
    %1 = arith.extui %0 : i1 to i32
    %c0_i32_0 = arith.constant 0 : i32
    %2 = arith.cmpi ne, %1, %c0_i32_0 : i32
    scf.if %2 {
      %cst_24 = arith.constant 0.000000e+00 : f32
      %44 = vector.broadcast %cst_24 : f32 to vector<1x128xf32>
      %c0_25 = arith.constant 0 : index
      %c0_26 = arith.constant 0 : index
      %45 = vector.load %arg8[%c0_25, %c0_26] : memref<1x128xf32, #tpu.memory_space<vmem>>, vector<1x128xf32>
      tpu.vector_store %arg8[%c0_25, %c0_26], %44 {strides = array<i32>} : memref<1x128xf32, #tpu.memory_space<vmem>>, vector<1x128xf32>,
    } else {
    }
    %c0 = arith.constant 0 : index
    %c0_1 = arith.constant 0 : index
    %c0_2 = arith.constant 0 : index
    %3 = vector.load %arg2[%c0, %c0_1, %c0_2] : memref<1x4x256xbf16, #tpu.memory_space<vmem>>, vector<1x4x256xbf16>
    %4 = vector.shape_cast %3 : vector<1x4x256xbf16> to vector<4x256xbf16>
    %c0_3 = arith.constant 0 : index
    %c0_4 = arith.constant 0 : index
    %5 = vector.load %arg3[%c0_3, %c0_4] : memref<256x128xbf16, #tpu.memory_space<vmem>>, vector<256x128xbf16>
    %cst = arith.constant dense<0.000000e+00> : vector<4x128xf32>
    %6 = tpu.matmul %4, %5, %cst {dimension_numbers = #tpu.dot_dimension_numbers<[1], [0], [0], [1], [0, 0, 1, 1], [], []>} : vector<4x256xbf16>, vector<256x128xbf16>, vector<4x128xf32> -> vector<4x128xf32>
    %7 = vector.shape_cast %6 : vector<4x128xf32> to vector<1x4x128xf32>
    %c0_5 = arith.constant 0 : index
    %c0_6 = arith.constant 0 : index
    %c0_7 = arith.constant 0 : index
    %8 = vector.load %arg4[%c0_5, %c0_6, %c0_7] : memref<1x4x128xbf16, #tpu.memory_space<vmem>>, vector<1x4x128xbf16>
    %9 = arith.extf %8 : vector<1x4x128xbf16> to vector<1x4x128xf32>
    %10 = arith.addf %7, %9 : vector<1x4x128xf32>
    %cst_8 = arith.constant dense<0.000000e+00> : vector<1x4xf32>
    %11 = vector.multi_reduction <add>, %10, %cst_8 [2] : vector<1x4x128xf32> to vector<1x4xf32>
    %12 = vector.shape_cast %11 : vector<1x4xf32> to vector<1x4x1xf32>
    %13 = arith.mulf %10, %10 : vector<1x4x128xf32>
    %cst_9 = arith.constant dense<0.000000e+00> : vector<1x4xf32>
    %14 = vector.multi_reduction <add>, %13, %cst_9 [2] : vector<1x4x128xf32> to vector<1x4xf32>
    %15 = vector.shape_cast %14 : vector<1x4xf32> to vector<1x4x1xf32>
    %cst_10 = arith.constant 7.812500e-03 : f32
    %16 = vector.broadcast %cst_10 : f32 to vector<1x4x1xf32>
    %17 = arith.mulf %12, %16 : vector<1x4x1xf32>
    %cst_11 = arith.constant 7.812500e-03 : f32
    %18 = vector.broadcast %cst_11 : f32 to vector<1x4x1xf32>
    %19 = arith.mulf %15, %18 : vector<1x4x1xf32>
    %20 = arith.mulf %17, %17 : vector<1x4x1xf32>
    %21 = arith.subf %19, %20 : vector<1x4x1xf32>
    %22 = vector.broadcast %17 : vector<1x4x1xf32> to vector<1x4x128xf32>
    %23 = arith.subf %10, %22 : vector<1x4x128xf32>
    %cst_12 = arith.constant 9.99999997E-7 : f32
    %24 = vector.broadcast %cst_12 : f32 to vector<1x4x1xf32>
    %25 = arith.addf %21, %24 : vector<1x4x1xf32>
    %26 = math.rsqrt %25 : vector<1x4x1xf32>
    %27 = vector.broadcast %26 : vector<1x4x1xf32> to vector<1x4x128xf32>
    %28 = arith.mulf %23, %27 : vector<1x4x128xf32>
    %c0_13 = arith.constant 0 : index
    %c0_14 = arith.constant 0 : index
    %29 = vector.load %arg5[%c0_13, %c0_14] : memref<1x128xf32, #tpu.memory_space<vmem>>, vector<1x128xf32>
    %30 = vector.shape_cast %29 : vector<1x128xf32> to vector<1x1x128xf32>
    %31 = vector.broadcast %30 : vector<1x1x128xf32> to vector<1x4x128xf32>
    %32 = arith.mulf %28, %31 : vector<1x4x128xf32>
    %c0_15 = arith.constant 0 : index
    %c0_16 = arith.constant 0 : index
    %33 = vector.load %arg6[%c0_15, %c0_16] : memref<1x128xf32, #tpu.memory_space<vmem>>, vector<1x128xf32>
    %34 = vector.shape_cast %33 : vector<1x128xf32> to vector<1x1x128xf32>
    %35 = vector.broadcast %34 : vector<1x1x128xf32> to vector<1x4x128xf32>
    %36 = arith.addf %32, %35 : vector<1x4x128xf32>
    %c0_17 = arith.constant 0 : index
    %c0_18 = arith.constant 0 : index
    %37 = vector.load %arg8[%c0_17, %c0_18] : memref<1x128xf32, #tpu.memory_space<vmem>>, vector<1x128xf32>
    %cst_19 = arith.constant dense<0.000000e+00> : vector<1x128xf32>
    %38 = vector.multi_reduction <add>, %36, %cst_19 [1] : vector<1x4x128xf32> to vector<1x128xf32>
    %39 = arith.addf %37, %38 : vector<1x128xf32>
    %c0_20 = arith.constant 0 : index
    %c0_21 = arith.constant 0 : index
    %40 = vector.load %arg8[%c0_20, %c0_21] : memref<1x128xf32, #tpu.memory_space<vmem>>, vector<1x128xf32>
    tpu.vector_store %arg8[%c0_20, %c0_21], %39 {strides = array<i32>} : memref<1x128xf32, #tpu.memory_space<vmem>>, vector<1x128xf32>,
    %c0_i32_22 = arith.constant 0 : i32
    %41 = arith.cmpi eq, %arg1, %c0_i32_22 : i32
    %42 = arith.extui %41 : i1 to i32
    %c0_i32_23 = arith.constant 0 : i32
    %43 = arith.cmpi ne, %42, %c0_i32_23 : i32
    scf.if %43 {
      %c0_24 = arith.constant 0 : index
      %c0_25 = arith.constant 0 : index
      %44 = vector.load %arg8[%c0_24, %c0_25] : memref<1x128xf32, #tpu.memory_space<vmem>>, vector<1x128xf32>
      %cst_26 = arith.constant 2.500000e-01 : f32
      %45 = vector.broadcast %cst_26 : f32 to vector<1x128xf32>
      %46 = arith.mulf %44, %45 : vector<1x128xf32>
      %47 = vector.shape_cast %46 : vector<1x128xf32> to vector<1x1x128xf32>
      %c0_27 = arith.constant 0 : index
      %c0_28 = arith.constant 0 : index
      %c0_29 = arith.constant 0 : index
      %48 = vector.load %arg7[%c0_27, %c0_28, %c0_29] : memref<1x1x128xf32, #tpu.memory_space<vmem>>, vector<1x1x128xf32>
      tpu.vector_store %arg7[%c0_27, %c0_28, %c0_29], %47 {strides = array<i32>} : memref<1x1x128xf32, #tpu.memory_space<vmem>>, vector<1x1x128xf32>,
    } else {
    }
    return
  }
  func.func @transform_0(%arg0: i32, %arg1: i32) -> (i32, i32, i32) {
    %c0_i32 = arith.constant 0 : i32
    %c0_i32_0 = arith.constant 0 : i32
    return %arg0, %arg1, %c0_i32 : i32, i32, i32
  }
  func.func @transform_1(%arg0: i32, %arg1: i32) -> (i32, i32) {
    %c0_i32 = arith.constant 0 : i32
    %c0_i32_0 = arith.constant 0 : i32
    %c0_i32_1 = arith.constant 0 : i32
    return %c0_i32, %c0_i32_0 : i32, i32
  }
  func.func @transform_2(%arg0: i32, %arg1: i32) -> (i32, i32, i32) {
    %c0_i32 = arith.constant 0 : i32
    %c0_i32_0 = arith.constant 0 : i32
    %c0_i32_1 = arith.constant 0 : i32
    return %c0_i32, %arg1, %c0_i32_0 : i32, i32, i32
  }
  func.func @transform_3(%arg0: i32, %arg1: i32) -> (i32, i32) {
    %c0_i32 = arith.constant 0 : i32
    %c0_i32_0 = arith.constant 0 : i32
    %c0_i32_1 = arith.constant 0 : i32
    return %c0_i32, %c0_i32_0 : i32, i32
  }
  func.func @transform_4(%arg0: i32, %arg1: i32) -> (i32, i32) {
    %c0_i32 = arith.constant 0 : i32
    %c0_i32_0 = arith.constant 0 : i32
    %c0_i32_1 = arith.constant 0 : i32
    return %c0_i32, %c0_i32_0 : i32, i32
  }
  func.func @transform_5(%arg0: i32, %arg1: i32) -> (i32, i32, i32) {
    %c0_i32 = arith.constant 0 : i32
    %c0_i32_0 = arith.constant 0 : i32
    %c0_i32_1 = arith.constant 0 : i32
    return %arg0, %c0_i32, %c0_i32_0 : i32, i32, i32
  }
}

</mosaic_0001>

<llo_original>
// kernel: dinov2_wrapper_forward_features.1
$region0: #{dinov2_wrapper_forward_features.1}
  #allocation0 [shape = 'u32[]', space=smem, size = 0x4, offset = 0x4, fixed_abs, tag = 'smem constant byte address 0x4 - core index']
  #allocation1 [shape = 'u32[144,128]{1,0:T(1,128)}', space=vmem, size = 0x12000, scoped, tag = 'internal scratch']
  #allocation2 [shape = 'f32[1,128]{1,0:T(1,128)}', space=vmem, size = 0x200, scoped, tag = 'scratch operand']
  %s0 = inlined_call_operand.vmem [shape: bf16[2,4,256], index: 0, kind: input, shape index: {}]
  %s1 = inlined_call_operand.vmem [shape: bf16[256,128], index: 1, kind: input, shape index: {}]
  %s2 = inlined_call_operand.vmem [shape: bf16[1,4,128], index: 2, kind: input, shape index: {}]
  %s3 = inlined_call_operand.vmem [shape: f32[1,128], index: 3, kind: input, shape index: {}]
  %s4 = inlined_call_operand.vmem [shape: f32[1,128], index: 4, kind: input, shape index: {}]
  %s5 = inlined_call_operand.hbm [shape: f32[2,1,128], index: 5, kind: output, shape index: {}]
  %s6 = sld [smem:[#allocation0]]
  $region61: #{dinov2_wrapper_forward_features.1} parent=0
    _
  %s8 = ssub.s32 1, %s6
  %s9 = scalar_select 0, %s8, %s6
  $region1: #{dinov2_wrapper_forward_features.1} parent=0
    #allocation3 [shape = 'u8[1024]{0}', space=vmem, size = 0x400, scoped, tag = 'output window, operand 0']
    #allocation4 [shape = 's32[2]{0}', space=sflag, size = 0x8, scoped, tag = 'scoped memory for dinov2_wrapper_forward_features.1']
    %10 = vsyncpa [#allocation4], 0
    %s11 = scalar_lea.sflag [#allocation4], 1
    %12 = vsyncpa %s11, 0
    loop: start=0, step=1, limit=4
    $region2: #{dinov2_wrapper_forward_features.1} parent=1 // loop_pre_header
      _
    $region3: #{dinov2_wrapper_forward_features.1} parent=1 // loop_header
      %s14 = sphi 0, %s18
      %p15 = scmp.ge.s32.totalorder %s14, 4
      %s21 = sphi 0, %s33
      %s22 = sphi 0, %s29
      %s23 = sphi 0, %s21
      %s24 = sphi 0, %s22
      %s25 = sphi 0, %s23
      %s26 = sphi 0, %s24
      %s38 = sphi 0, %s40
      %s41 = sphi 0, %s38
      %s42 = sphi 0, %s41
      %s58 = sphi 0, %s42
      %s62 = sphi 0, %s62
      %s64 = sphi 0, %s62
      %s65 = sphi 0, %s64
      %s79 = sphi 0, %s65
      %s85 = sphi 0, %s87
      %s88 = sphi 0, %s85
      %s89 = sphi 0, %s88
      %s105 = sphi 0, %s89
      %s109 = sphi 0, %s109
      %s111 = sphi 0, %s109
      %s112 = sphi 0, %s111
      %s126 = sphi 0, %s112
      %s130 = sphi 0, %s130
      %s132 = sphi 0, %s130
      %s133 = sphi 0, %s132
      %s147 = sphi 0, %s133
      %s153 = sphi 0, %s155
      %s156 = sphi 0, %s153
      %s157 = sphi 0, %s156
      %s173 = sphi 0, %s157
    $region4: #{dinov2_wrapper_forward_features.1} parent=1 // loop_header_branch
      %17 = sbr.rel (%p15) target = $region8
    $region5: #{dinov2_wrapper_forward_features.1} parent=1 // loop_body
      %s19 = ssub.s32 %s14, 1
      %s20 = ssub.s32 %s14, 2
      %s27 = sadd.s32 1, %s22
      %p28 = scmp.ge.s32.totalorder %s27, 1
      %s29 = scalar_select %p28, 0, %s27
      %s30 = sadd.s32 1, %s21
      %s31 = scalar_select %p28, %s30, %s21
      %p32 = scmp.ge.s32.totalorder %s31, 2
      %s33 = scalar_select %p32, 0, %s31
      %s34 = ssub.s32 %s21, %s33
      %s35 = ssub.s32 %s22, %s29
      %s36 = sor.u32 %s34, %s35
      %p37 = scmp.eq.s32.totalorder %s36, 0
      %s39 = sadd.s32 %s38, 1
      %s40 = scalar_select %p37, %s38, %s39
      %p43 = pneg %p37
      %p44 = scmp.eq.s32.totalorder %s14, 1
      %p45 = por %p43, %p44
      %p46 = scmp.ne.s32.totalorder %s38, %s41
      %p47 = scmp.eq.s32.totalorder %s14, 0
      %p48 = por %p46, %p47
      %p49 = scmp.ne.s32.totalorder %s38, %s41
      %p50 = scmp.eq.s32.totalorder %s19, 1
      %p51 = por %p49, %p50
      %p52 = scmp.ne.s32.totalorder %s41, %s42
      %p53 = scmp.eq.s32.totalorder %s19, 0
      %p54 = por %p52, %p53
      %p55 = scmp.ne.s32.totalorder %s41, %s42
      %p56 = scmp.eq.s32.totalorder %s20, 1
      %p57 = por %p55, %p56
      %p59 = scmp.ne.s32.totalorder %s42, %s58
      %p60 = scmp.eq.s32.totalorder %s20, 0
      %p61 = por %p59, %p60
      %s63 = sadd.s32 %s62, 1
      %p66 = scmp.eq.s32.totalorder %s14, 1
      %p67 = scmp.ne.s32.totalorder %s62, %s64
      %p68 = scmp.eq.s32.totalorder %s14, 0
      %p69 = por %p67, %p68
      %p70 = scmp.ne.s32.totalorder %s62, %s64
      %p71 = scmp.eq.s32.totalorder %s19, 1
      %p72 = por %p70, %p71
      %p73 = scmp.ne.s32.totalorder %s64, %s65
      %p74 = scmp.eq.s32.totalorder %s19, 0
      %p75 = por %p73, %p74
      %p76 = scmp.ne.s32.totalorder %s64, %s65
      %p77 = scmp.eq.s32.totalorder %s20, 1
      %p78 = por %p76, %p77
      %p80 = scmp.ne.s32.totalorder %s65, %s79
      %p81 = scmp.eq.s32.totalorder %s20, 0
      %p82 = por %p80, %p81
      %s83 = ssub.s32 %s22, %s29
      %p84 = scmp.eq.s32.totalorder %s83, 0
      %s86 = sadd.s32 %s85, 1
      %s87 = scalar_select %p84, %s85, %s86
      %p90 = pneg %p84
      %p91 = scmp.eq.s32.totalorder %s14, 1
      %p92 = por %p90, %p91
      %p93 = scmp.ne.s32.totalorder %s85, %s88
      %p94 = scmp.eq.s32.totalorder %s14, 0
      %p95 = por %p93, %p94
      %p96 = scmp.ne.s32.totalorder %s85, %s88
      %p97 = scmp.eq.s32.totalorder %s19, 1
      %p98 = por %p96, %p97
      %p99 = scmp.ne.s32.totalorder %s88, %s89
      %p100 = scmp.eq.s32.totalorder %s19, 0
      %p101 = por %p99, %p100
      %p102 = scmp.ne.s32.totalorder %s88, %s89
      %p103 = scmp.eq.s32.totalorder %s20, 1
      %p104 = por %p102, %p103
      %p106 = scmp.ne.s32.totalorder %s89, %s105
      %p107 = scmp.eq.s32.totalorder %s20, 0
      %p108 = por %p106, %p107
      %s110 = sadd.s32 %s109, 1
      %p113 = scmp.eq.s32.totalorder %s14, 1
      %p114 = scmp.ne.s32.totalorder %s109, %s111
      %p115 = scmp.eq.s32.totalorder %s14, 0
      %p116 = por %p114, %p115
      %p117 = scmp.ne.s32.totalorder %s109, %s111
      %p118 = scmp.eq.s32.totalorder %s19, 1
      %p119 = por %p117, %p118
      %p120 = scmp.ne.s32.totalorder %s111, %s112
      %p121 = scmp.eq.s32.totalorder %s19, 0
      %p122 = por %p120, %p121
      %p123 = scmp.ne.s32.totalorder %s111, %s112
      %p124 = scmp.eq.s32.totalorder %s20, 1
      %p125 = por %p123, %p124
      %p127 = scmp.ne.s32.totalorder %s112, %s126
      %p128 = scmp.eq.s32.totalorder %s20, 0
      %p129 = por %p127, %p128
      %s131 = sadd.s32 %s130, 1
      %p134 = scmp.eq.s32.totalorder %s14, 1
      %p135 = scmp.ne.s32.totalorder %s130, %s132
      %p136 = scmp.eq.s32.totalorder %s14, 0
      %p137 = por %p135, %p136
      %p138 = scmp.ne.s32.totalorder %s130, %s132
      %p139 = scmp.eq.s32.totalorder %s19, 1
      %p140 = por %p138, %p139
      %p141 = scmp.ne.s32.totalorder %s132, %s133
      %p142 = scmp.eq.s32.totalorder %s19, 0
      %p143 = por %p141, %p142
      %p144 = scmp.ne.s32.totalorder %s132, %s133
      %p145 = scmp.eq.s32.totalorder %s20, 1
      %p146 = por %p144, %p145
      %p148 = scmp.ne.s32.totalorder %s133, %s147
      %p149 = scmp.eq.s32.totalorder %s20, 0
      %p150 = por %p148, %p149
      %s151 = ssub.s32 %s21, %s33
      %p152 = scmp.eq.s32.totalorder %s151, 0
      %s154 = sadd.s32 %s153, 1
      %s155 = scalar_select %p152, %s153, %s154
      %p158 = pneg %p152
      %p159 = scmp.eq.s32.totalorder %s14, 1
      %p160 = por %p158, %p159
      %p161 = scmp.ne.s32.totalorder %s153, %s156
      %p162 = scmp.eq.s32.totalorder %s14, 0
      %p163 = por %p161, %p162
      %p164 = scmp.ne.s32.totalorder %s153, %s156
      %p165 = scmp.eq.s32.totalorder %s19, 1
      %p166 = por %p164, %p165
      %p167 = scmp.ne.s32.totalorder %s156, %s157
      %p168 = scmp.eq.s32.totalorder %s19, 0
      %p169 = por %p167, %p168
      %p170 = scmp.ne.s32.totalorder %s156, %s157
      %p171 = scmp.eq.s32.totalorder %s20, 1
      %p172 = por %p170, %p171
      %p174 = scmp.ne.s32.totalorder %s157, %s173
      %p175 = scmp.eq.s32.totalorder %s20, 0
      %p176 = por %p174, %p175
      %p177 = scmp.le.s32.totalorder 1, %s14
      %p178 = scmp.lt.s32.totalorder %s14, 3
      %p179 = pnand %p177, %p178
      %p180 = pneg %p179
      // Predicated region
      $region9: #{dinov2_wrapper_forward_features.1} parent=5 // pred_check
        _
      $region10: #{dinov2_wrapper_forward_features.1} parent=5 // pred_check_branch
        %182 = sbr.rel (%p179) target = $region12
      $region11: #{dinov2_wrapper_forward_features.1} parent=5 // pred_region
        %s183 = ssub.s32 %s14, 1
        // Predicated region
        $region13: #{dinov2_wrapper_forward_features.1} parent=11 // pred_check
          %p184 = pneg %p75
        $region14: #{dinov2_wrapper_forward_features.1} parent=11 // pred_check_branch
          %186 = sbr.rel (%p184) target = $region16
        $region15: #{dinov2_wrapper_forward_features.1} parent=11 // pred_region
          _
        $region16: #{dinov2_wrapper_forward_features.1} parent=11 // pred_fallthru
          _
        // Predicated region
        $region17: #{dinov2_wrapper_forward_features.1} parent=11 // pred_check
          %p187 = pneg %p101
        $region18: #{dinov2_wrapper_forward_features.1} parent=11 // pred_check_branch
          %189 = sbr.rel (%p187) target = $region20
        $region19: #{dinov2_wrapper_forward_features.1} parent=11 // pred_region
          %p190 = scmp.lt.s32.totalorder %s24, 0
          %s191 = scalar_select %p190, %s24, 0
          %s192 = smul.addr %s191, 2
          %s193 = scalar_lea.vmem %s2, %s192
        $region20: #{dinov2_wrapper_forward_features.1} parent=11 // pred_fallthru
          _
        // Predicated region
        $region21: #{dinov2_wrapper_forward_features.1} parent=11 // pred_check
          %p194 = pneg %p122
        $region22: #{dinov2_wrapper_forward_features.1} parent=11 // pred_check_branch
          %196 = sbr.rel (%p194) target = $region24
        $region23: #{dinov2_wrapper_forward_features.1} parent=11 // pred_region
          _
        $region24: #{dinov2_wrapper_forward_features.1} parent=11 // pred_fallthru
          _
        // Predicated region
        $region25: #{dinov2_wrapper_forward_features.1} parent=11 // pred_check
          %p197 = pneg %p143
        $region26: #{dinov2_wrapper_forward_features.1} parent=11 // pred_check_branch
          %199 = sbr.rel (%p197) target = $region28
        $region27: #{dinov2_wrapper_forward_features.1} parent=11 // pred_region
          _
        $region28: #{dinov2_wrapper_forward_features.1} parent=11 // pred_fallthru
          _
      $region12: #{dinov2_wrapper_forward_features.1} parent=5 // pred_fallthru
        _
      %p200 = scmp.lt.s32.totalorder %s14, 2
      // Predicated region
      $region29: #{dinov2_wrapper_forward_features.1} parent=5 // pred_check
        %p201 = pneg %p200
      $region30: #{dinov2_wrapper_forward_features.1} parent=5 // pred_check_branch
        %203 = sbr.rel (%p201) target = $region32
      $region31: #{dinov2_wrapper_forward_features.1} parent=5 // pred_region
        // Predicated region
        $region33: #{dinov2_wrapper_forward_features.1} parent=31 // pred_check
          %p204 = pneg %p48
        $region34: #{dinov2_wrapper_forward_features.1} parent=31 // pred_check_branch
          %206 = sbr.rel (%p204) target = $region36
        $region35: #{dinov2_wrapper_forward_features.1} parent=31 // pred_region
          %p207 = scmp.lt.s32.totalorder %s21, 1
          %s208 = scalar_select %p207, %s21, 1
          %p209 = scmp.lt.s32.totalorder %s22, 0
          %s210 = scalar_select %p209, %s22, 0
          %s211 = smul.addr %s210, 2
          %s212 = smul.addr %s208, 2
          %s213 = sadd.s32 %s211, %s212
          %s214 = smul.addr %s213, 2
          %s215 = scalar_lea.vmem %s0, %s214
        $region36: #{dinov2_wrapper_forward_features.1} parent=31 // pred_fallthru
          _
      $region32: #{dinov2_wrapper_forward_features.1} parent=5 // pred_fallthru
        _
      %p216 = scmp.le.s32.totalorder 1, %s14
      %p217 = scmp.lt.s32.totalorder %s14, 3
      %p218 = pnand %p216, %p217
      %p219 = pneg %p218
      // Predicated region
      $region37: #{dinov2_wrapper_forward_features.1} parent=5 // pred_check
        _
      $region38: #{dinov2_wrapper_forward_features.1} parent=5 // pred_check_branch
        %221 = sbr.rel (%p218) target = $region40
      $region39: #{dinov2_wrapper_forward_features.1} parent=5 // pred_region
        %s222 = ssub.s32 %s14, 1
        %p223 = scmp.lt.s32.totalorder %s23, 1
        %s224 = scalar_select %p223, %s23, 1
        %p225 = scmp.lt.s32.totalorder %s24, 0
        %s226 = scalar_select %p225, %s24, 0
        %s227 = smul.addr %s226, 2
        %s228 = smul.addr %s224, 2
        %s229 = sadd.s32 %s227, %s228
        %s230 = smul.addr %s229, 2
        %s231 = scalar_lea.vmem %s0, %s230
        %p232 = pneg %p54
        %p233 = pneg %p51
        %p234 = pneg %p75
        %p235 = pneg %p72
        %p236 = scmp.lt.s32.totalorder %s24, 0
        %s237 = scalar_select %p236, %s24, 0
        %s238 = smul.addr %s237, 2
        %s239 = scalar_lea.vmem %s2, %s238
        %p240 = pneg %p101
        %p241 = pneg %p98
        %p242 = pneg %p122
        %p243 = pneg %p119
        %p244 = pneg %p143
        %p245 = pneg %p140
        %p246 = pneg %p169
        %p247 = pneg %p166
        %s248 = sand.u32 %s156, 1
        %s249 = scalar_lea.sflag [#allocation4], %s248
        %s250 = sand.u32 %s156, 1
        %s251 = scalar_lea.vmem [#allocation3], %s250
        %p252 = scmp.lt.s32.totalorder %s23, 1
        %s253 = scalar_select %p252, %s23, 1
        %p254 = scmp.lt.s32.totalorder %s24, 0
        %s255 = scalar_select %p254, %s24, 0
        %s256 = smul.addr %s255, 2
        %s257 = smul.addr %s253, 2
        %s258 = sadd.s32 %s256, %s257
        %s259 = smul.addr %s258, 2
        %s260 = scalar_lea.vmem %s0, %s259
        %p261 = scmp.lt.s32.totalorder %s24, 0
        %s262 = scalar_select %p261, %s24, 0
        %s263 = smul.addr %s262, 2
        %s264 = scalar_lea.vmem %s2, %s263
        %p266 = scmp.eq.s32.totalorder %s24, 0
        // Predicated region
        $region41: #{dinov2_wrapper_forward_features.1} parent=39 // pred_check
          %p267 = pneg %p266
        $region42: #{dinov2_wrapper_forward_features.1} parent=39 // pred_check_branch
          %269 = sbr.rel (%p267) target = $region44
        $region43: #{dinov2_wrapper_forward_features.1} parent=39 // pred_region
          %270 = vst [vmem:[#allocation2] sm:$0x1] 0.0
        $region44: #{dinov2_wrapper_forward_features.1} parent=39 // pred_fallthru
          _
        %v271 = vld [vmem:[%s260] sm:$0xf]
        %v272 = vld [vmem:[%s1] sm:$0xf]
        %v273 = vld [vmem:[%s1 + $0x4] sm:$0xf]
        %v274 = vld [vmem:[%s1 + $0x8] sm:$0xf]
        %v275 = vld [vmem:[%s1 + $0xc] sm:$0xf]
        %v276 = vld [vmem:[%s1 + $0x10] sm:$0xf]
        %v277 = vld [vmem:[%s1 + $0x14] sm:$0xf]
        %v278 = vld [vmem:[%s1 + $0x18] sm:$0xf]
        %v279 = vld [vmem:[%s1 + $0x1c] sm:$0xf]
        %v280 = vld [vmem:[%s1 + $0x20] sm:$0xf]
        %v281 = vld [vmem:[%s1 + $0x24] sm:$0xf]
        %v282 = vld [vmem:[%s1 + $0x28] sm:$0xf]
        %v283 = vld [vmem:[%s1 + $0x2c] sm:$0xf]
        %v284 = vld [vmem:[%s1 + $0x30] sm:$0xf]
        %v285 = vld [vmem:[%s1 + $0x34] sm:$0xf]
        %v286 = vld [vmem:[%s1 + $0x38] sm:$0xf]
        %v287 = vld [vmem:[%s1 + $0x3c] sm:$0xf]
        %v288 = vld [vmem:[%s1 + $0x40] sm:$0xf]
        %v289 = vld [vmem:[%s1 + $0x44] sm:$0xf]
        %v290 = vld [vmem:[%s1 + $0x48] sm:$0xf]
        %v291 = vld [vmem:[%s1 + $0x4c] sm:$0xf]
        %v292 = vld [vmem:[%s1 + $0x50] sm:$0xf]
        %v293 = vld [vmem:[%s1 + $0x54] sm:$0xf]
        %v294 = vld [vmem:[%s1 + $0x58] sm:$0xf]
        %v295 = vld [vmem:[%s1 + $0x5c] sm:$0xf]
        %v296 = vld [vmem:[%s1 + $0x60] sm:$0xf]
        %v297 = vld [vmem:[%s1 + $0x64] sm:$0xf]
        %v298 = vld [vmem:[%s1 + $0x68] sm:$0xf]
        %v299 = vld [vmem:[%s1 + $0x6c] sm:$0xf]
        %v300 = vld [vmem:[%s1 + $0x70] sm:$0xf]
        %v301 = vld [vmem:[%s1 + $0x74] sm:$0xf]
        %v302 = vld [vmem:[%s1 + $0x78] sm:$0xf]
        %v303 = vld [vmem:[%s1 + $0x7c] sm:$0xf]
        %v306 = vunpack.c.l.s4 1983009808
        %v307 = vunpack.c.0.s8 %v306
        %v308 = vlaneseq
        %v309 = vshrl.u32 %v308, 7
        %v310 = vsub.s32 %v307, %v309
        %v311 = vrot.slane %v271, %v310
        %v312 = vcombine.high %v311, %v311
        %v347 = vunpack.c.l.b16 %v272
        %v348 = vunpack.c.l.b16 %v273
        %v349 = vunpack.c.l.b16 %v274
        %v350 = vunpack.c.l.b16 %v275
        %v351 = vunpack.c.l.b16 %v276
        %v352 = vunpack.c.l.b16 %v277
        %v353 = vunpack.c.l.b16 %v278
        %v354 = vunpack.c.l.b16 %v279
        %v355 = vunpack.c.l.b16 %v280
        %v356 = vunpack.c.l.b16 %v281
        %v357 = vunpack.c.l.b16 %v282
        %v358 = vunpack.c.l.b16 %v283
        %v359 = vunpack.c.l.b16 %v284
        %v360 = vunpack.c.l.b16 %v285
        %v361 = vunpack.c.l.b16 %v286
        %v362 = vunpack.c.l.b16 %v287
        %v363 = vunpack.c.l.b16 %v288
        %v364 = vunpack.c.l.b16 %v289
        %v365 = vunpack.c.l.b16 %v290
        %v366 = vunpack.c.l.b16 %v291
        %v367 = vunpack.c.l.b16 %v292
        %v368 = vunpack.c.l.b16 %v293
        %v369 = vunpack.c.l.b16 %v294
        %v370 = vunpack.c.l.b16 %v295
        %v371 = vunpack.c.l.b16 %v296
        %v372 = vunpack.c.l.b16 %v297
        %v373 = vunpack.c.l.b16 %v298
        %v374 = vunpack.c.l.b16 %v299
        %v375 = vunpack.c.l.b16 %v300
        %v376 = vunpack.c.l.b16 %v301
        %v377 = vunpack.c.l.b16 %v302
        %v378 = vunpack.c.l.b16 %v303
        %v379 = vpack.c.b16 %v348, %v347
        %v380 = vpack.c.b16 %v350, %v349
        %v381 = vpack.c.b16 %v352, %v351
        %v382 = vpack.c.b16 %v354, %v353
        %v383 = vpack.c.b16 %v356, %v355
        %v384 = vpack.c.b16 %v358, %v357
        %v385 = vpack.c.b16 %v360, %v359
        %v386 = vpack.c.b16 %v362, %v361
        %v387 = vpack.c.b16 %v364, %v363
        %v388 = vpack.c.b16 %v366, %v365
        %v389 = vpack.c.b16 %v368, %v367
        %v390 = vpack.c.b16 %v370, %v369
        %v391 = vpack.c.b16 %v372, %v371
        %v392 = vpack.c.b16 %v374, %v373
        %v393 = vpack.c.b16 %v376, %v375
        %v394 = vpack.c.b16 %v378, %v377
        %411 = vmatprep.subr.bf16.mxu0 0
        %412 = vmatpush1.bf16.msra.mxu0 %v386
        %413 = vmatprep.subr.bf16.mxu0 0
        %414 = vmatpush1.bf16.msra.mxu0 %v385
        %415 = vmatprep.subr.bf16.mxu0 0
        %416 = vmatpush1.bf16.msra.mxu0 %v384
        %417 = vmatprep.subr.bf16.mxu0 0
        %418 = vmatpush1.bf16.msra.mxu0 %v383
        %419 = vmatprep.subr.bf16.mxu0 0
        %420 = vmatpush1.bf16.msra.mxu0 %v382
        %421 = vmatprep.subr.bf16.mxu0 0
        %422 = vmatpush1.bf16.msra.mxu0 %v381
        %423 = vmatprep.subr.bf16.mxu0 0
        %424 = vmatpush1.bf16.msra.mxu0 %v380
        %425 = vmatprep.subr.bf16.mxu0 0
        %426 = vmatpush1.bf16.msra.mxu0 %v379
        %427 = vmatprep.subr.bf16.mxu0 0
        %428 = vmatpush2.bf16.msra.mxu0 %v394
        %429 = vmatprep.subr.bf16.mxu0 0
        %430 = vmatpush2.bf16.msra.mxu0 %v393
        %431 = vmatprep.subr.bf16.mxu0 0
        %432 = vmatpush2.bf16.msra.mxu0 %v392
        %433 = vmatprep.subr.bf16.mxu0 0
        %434 = vmatpush2.bf16.msra.mxu0 %v391
        %435 = vmatprep.subr.bf16.mxu0 0
        %436 = vmatpush2.bf16.msra.mxu0 %v390
        %437 = vmatprep.subr.bf16.mxu0 0
        %438 = vmatpush2.bf16.msra.mxu0 %v389
        %439 = vmatprep.subr.bf16.mxu0 0
        %440 = vmatpush2.bf16.msra.mxu0 %v388
        %441 = vmatprep.subr.bf16.mxu0 0
        %442 = vmatpush2.bf16.msra.mxu0 %v387
        %443 = vmatprep.mubr.bf16.mxu0 %v312
        %444 = vmatmul.mubr.bf16.gmra.mxu0 %v311
        %v445 = vpop.f32.mrf.mxu0
        %v446 = vadd.f32 0.0, %v445
        %v447 = vpop.f32.mrf.mxu0
        %v448 = vpop.f32.mrf.mxu0
        %v449 = vpop.f32.mrf.mxu0
        %450 = vdwg.mxu0
        %v451 = vld [vmem:[%s264] sm:$0x3]
        %v452 = vunpack.c.l.bf16 %v451
        %v453 = vadd.f32 %v446, %v452
        %vm454 = vcmask 1043456
        %v455 = vsel %vm454, %v453, 0.0
        %456 = vadd.xlane.f32.xlu0 %v455
        %v457 = vpop.xlane.xlu0 %456
        %v458 = vmul.f32 %v453, %v453
        %v459 = vsel %vm454, %v458, 0.0
        %460 = vadd.xlane.f32.xlu0 %v459
        %v461 = vpop.xlane.xlu0 %460
        %v462 = vmul.f32 %v457, 0.0078125
        %v463 = vmul.f32 %v461, 0.0078125
        %v464 = vmul.f32 %v462, %v462
        %v465 = vsub.f32 %v463, %v464
        %v466 = vsub.f32 %v453, %v462
        %v467 = vadd.f32 %v465, 1e-06
        %v468 = vrsqrt.pop %v467
        %v469 = vmul.f32 %v466, %v468
        %v470 = vld [vmem:[%s3] sm:$0x1]
        %v472 = vlaneseq
        %v473 = vshrl.u32 %v472, 7
        %v474 = vsub.s32 0, %v473
        %v475 = vrot.slane %v470, %v474
        %v477 = vmul.f32 %v469, %v475
        %v478 = vld [vmem:[%s4] sm:$0x1]
        %v480 = vlaneseq
        %v481 = vshrl.u32 %v480, 7
        %v482 = vsub.s32 0, %v481
        %v483 = vrot.slane %v478, %v482
        %v485 = vadd.f32 %v477, %v483
        %v486 = vld [vmem:[#allocation2] sm:$0x1]
        %v487 = vsel %vm454, %v485, 0.0
        %v488 = vrot.slane %v487, 4
        %v489 = vadd.f32 %v487, %v488
        %v490 = vrot.slane %v489, 2
        %v491 = vadd.f32 %v489, %v490
        %v492 = vrot.slane %v491, 1
        %v493 = vadd.f32 %v491, %v492
        %v494 = vadd.f32 %v486, %v493
        %495 = vst [vmem:[#allocation2] sm:$0x1] %v494
        // Predicated region
        $region45: #{dinov2_wrapper_forward_features.1} parent=39 // pred_check
          %p496 = pneg %p266
        $region46: #{dinov2_wrapper_forward_features.1} parent=39 // pred_check_branch
          %498 = sbr.rel (%p496) target = $region48
        $region47: #{dinov2_wrapper_forward_features.1} parent=39 // pred_region
          %v499 = vld [vmem:[#allocation2] sm:$0x1]
          %v500 = vmul.f32 %v499, 0.25
          %501 = vst [vmem:[%s251] sm:$0x1] %v500
        $region48: #{dinov2_wrapper_forward_features.1} parent=39 // pred_fallthru
          _
        %s502 = sand.u32 %s156, 1
        %s503 = scalar_lea.sflag [#allocation4], %s502
        %s504 = sand.u32 %s156, 1
        %s505 = scalar_lea.vmem [#allocation3], %s504
        // Predicated region
        $region49: #{dinov2_wrapper_forward_features.1} parent=39 // pred_check
          %p506 = pneg %p166
        $region50: #{dinov2_wrapper_forward_features.1} parent=39 // pred_check_branch
          %508 = sbr.rel (%p506) target = $region52
        $region51: #{dinov2_wrapper_forward_features.1} parent=39 // pred_region
          %s510 = ssub.s32 16, 16
          %511 = vsyncadd %s503, %s510
          %s512 = smul.addr %s23, 16
          %s513 = scalar_lea.hbm %s5, %s512
          %s515 = sshll.u32 %s505, 4
          %s516 = int_to_ptr.vmem [resolvable:$true] %s515
          %518 = dma.vmem_to_hbm [thread:$0]  %s516, 16, %s513, %s503
        $region52: #{dinov2_wrapper_forward_features.1} parent=39 // pred_fallthru
          _
      $region40: #{dinov2_wrapper_forward_features.1} parent=5 // pred_fallthru
        _
      %p519 = scmp.le.s32.totalorder 2, %s14
      // Predicated region
      $region53: #{dinov2_wrapper_forward_features.1} parent=5 // pred_check
        %p520 = pneg %p519
      $region54: #{dinov2_wrapper_forward_features.1} parent=5 // pred_check_branch
        %522 = sbr.rel (%p520) target = $region56
      $region55: #{dinov2_wrapper_forward_features.1} parent=5 // pred_region
        %s523 = ssub.s32 %s14, 2
        // Predicated region
        $region57: #{dinov2_wrapper_forward_features.1} parent=55 // pred_check
          %p524 = pneg %p172
        $region58: #{dinov2_wrapper_forward_features.1} parent=55 // pred_check_branch
          %526 = sbr.rel (%p524) target = $region60
        $region59: #{dinov2_wrapper_forward_features.1} parent=55 // pred_region
          %s527 = sand.u32 %s157, 1
          %s528 = scalar_lea.sflag [#allocation4], %s527
          %s529 = sand.u32 %s157, 1
          %s530 = scalar_lea.vmem [#allocation3], %s529
          %531 = dma.done %s528, 16
        $region60: #{dinov2_wrapper_forward_features.1} parent=55 // pred_fallthru
          _
      $region56: #{dinov2_wrapper_forward_features.1} parent=5 // pred_fallthru
        _
    $region6: #{dinov2_wrapper_forward_features.1} parent=1 // loop_footer
      %s18 = sadd.s32 1, %s14
    $region7: #{dinov2_wrapper_forward_features.1} parent=1 // loop_footer_branch
      %13 = sbr.rel target = $region3
    $region8: #{dinov2_wrapper_forward_features.1} parent=1 // loop_exit
      _
    %532 = vsyncpa [#allocation4], 1
    %s533 = scalar_lea.sflag [#allocation4], 1
    %534 = vsyncpa %s533, 1

</llo_original>
